<compile_context>
chip_gen: v7x
topology: tpu7x:2x2x1
jax: 0.10.0
libtpu: 0.0.40
codegen_flags: <defaults>
</compile_context>

<pallas_src>
import functools

import jax
import jax.numpy as jnp
from jax.experimental import pallas as pl
from jax.experimental.pallas import tpu as pltpu


def _broadcast_store_kernel(tab_y_ref, tab_x_ref, out_ref, *, half, rb, W):
    """Materialize one (embed_dim, rb, W) block of the position table.

    tab_y_ref : VMEM f32[half, rb, 1] -- sin/cos values for this block's rows
    tab_x_ref : VMEM f32[half, 1, W]  -- sin/cos values for all columns (constant
                                         block index -> DMA'd only once)
    out_ref   : VMEM f32[2*half, rb, W]
    """
    # Rows [0, half): pos_y channels -> broadcast along the lane (x) axis.
    # Rows [half, 2*half): pos_x channels -> broadcast along the sublane (y) axis.
    # NOTE: if half % 8 != 0 the second store starts mid sublane-tile (masked
    # stores, slower but correct); typical embed_dims (128/256) are aligned.
    out_ref[:half, :, :] = jnp.broadcast_to(tab_y_ref[...], (half, rb, W))
    out_ref[half:, :, :] = jnp.broadcast_to(tab_x_ref[...], (half, rb, W))


def _choose_rows_per_block(H, W, embed_dim, budget_bytes=6 << 20):
    """Rows per output block.

    Requirements: rb divides H and (rb % 8 == 0 or rb == H)  [(8,128) rule].
    Preferences : double-buffered block <= budget (safe on v5e/v6e/v7x scoped
                  VMEM), and >= 2 grid steps so v7x megacore can split the work.
    """
    lane_pad = ((W + 127) // 128) * 128  # VMEM lane padding of the last dim

    def blk_bytes(rb):
        return embed_dim * (((rb + 7) // 8) * 8) * lane_pad * 4

    divs = [d for d in range(8, H + 1, 8) if H % d == 0]
    fitting = [d for d in divs if blk_bytes(d) <= budget_bytes]
    multi_step = [d for d in fitting if H // d >= 2]
    if multi_step:
        return max(multi_step)      # biggest block that still gives >= 2 steps
    if fitting:
        return max(fitting)
    if divs:
        return min(divs)            # aligned but above budget: take smallest
    return H                        # H has no multiple-of-8 divisor: full height


def position_embedding(x, temperature, *, embed_dim):
    """Pallas implementation of PositionEmbedding.forward.

    x           : (B, C, H, W)  -- only B, H, W are used (NCHW, like PyTorch)
    temperature : scalar float32 parameter
    returns     : (B, embed_dim, H, W) float32
    """
    assert embed_dim % 2 == 0, "Embed dim must be even"
    B, _, H, W = x.shape
    half = embed_dim // 2

    # ---- tiny separable tables: half*(H+W) transcendentals, computed once ----
    temp = jnp.asarray(temperature, dtype=jnp.float32)
    c = jnp.arange(half, dtype=jnp.float32)
    dim_t = temp ** (2.0 * jnp.floor(c / 2.0) / half)                  # (half,)
    odd = ((jnp.arange(half) % 2) == 1)[:, None]                       # (half, 1)

    y_arg = (jnp.arange(H, dtype=jnp.float32) / H)[None, :] / dim_t[:, None]  # (half, H)
    x_arg = (jnp.arange(W, dtype=jnp.float32) / W)[None, :] / dim_t[:, None]  # (half, W)
    tab_y = jnp.where(odd, jnp.cos(y_arg), jnp.sin(y_arg)).reshape(half, H, 1)
    tab_x = jnp.where(odd, jnp.cos(x_arg), jnp.sin(x_arg)).reshape(half, 1, W)

    rb = _choose_rows_per_block(H, W, embed_dim)
    grid = (H // rb,)

    # VMEM limit: actual double-buffered usage + headroom, capped well under
    # v7x's 64 MiB physical VMEM.
    lane_pad = ((W + 127) // 128) * 128
    sub_pad = ((rb + 7) // 8) * 8
    out_blk = embed_dim * sub_pad * lane_pad * 4
    in_blk = half * sub_pad * 128 * 4 + half * 8 * lane_pad * 4
    vmem_limit = int(min(max(2 * (out_blk + in_blk) + (4 << 20), 16 << 20), 48 << 20))

    pos_dhw = pl.pallas_call(
        functools.partial(_broadcast_store_kernel, half=half, rb=rb, W=W),
        out_shape=jax.ShapeDtypeStruct((embed_dim, H, W), jnp.float32),
        grid=grid,
        in_specs=[
            pl.BlockSpec((half, rb, 1), lambda i: (0, i, 0)),   # per-block y rows
            pl.BlockSpec((half, 1, W), lambda i: (0, 0, 0)),    # constant x table
        ],
        out_specs=pl.BlockSpec((embed_dim, rb, W), lambda i: (0, i, 0)),
        compiler_params=pltpu.CompilerParams(
            dimension_semantics=("parallel",),
            vmem_limit_bytes=vmem_limit,
        ),
    )(tab_y, tab_x)

    # (embed_dim, H, W) -> (1, embed_dim, H, W): free reshape, no transpose.
    pos = pos_dhw.reshape(1, embed_dim, H, W)
    # Matches the PyTorch .expand() output shape; the table itself is batch-
    # independent, so XLA can fuse this broadcast into the consumer.
    return jnp.broadcast_to(pos, (B, embed_dim, H, W))


def _reference(x, temperature, *, embed_dim):
    """Pure-JAX reference mirroring the PyTorch forward exactly."""
    B, _, H, W = x.shape
    half = embed_dim // 2
    dim_t = jnp.arange(half, dtype=jnp.float32)
    dim_t = temperature ** (2.0 * jnp.floor(dim_t / 2.0) / half)
    y_embed = (jnp.arange(H, dtype=jnp.float32)[:, None] / H) * jnp.ones((H, W))
    x_embed = (jnp.arange(W, dtype=jnp.float32)[None, :] / W) * jnp.ones((H, W))
    pos_x = x_embed.reshape(-1, 1) / dim_t
    pos_y = y_embed.reshape(-1, 1) / dim_t
    pos_x = jnp.stack([jnp.sin(pos_x[:, 0::2]), jnp.cos(pos_x[:, 1::2])], axis=2).reshape(H * W, -1)
    pos_y = jnp.stack([jnp.sin(pos_y[:, 0::2]), jnp.cos(pos_y[:, 1::2])], axis=2).reshape(H * W, -1)
    pos = jnp.concatenate([pos_y, pos_x], axis=1).T.reshape(1, embed_dim, H, W)
    return jnp.broadcast_to(pos, (B, embed_dim, H, W))


if __name__ == "__main__":
    # Small shapes: batch=2, channels=4, spatial=16x16, embed_dim=32.
    key = jax.random.PRNGKey(0)
    B, C, H, W = 2, 4, 16, 16
    embed_dim = 32

    x = jax.random.normal(key, (B, C, H, W), dtype=jnp.float32)
    # Deterministic parameter init: same default as the PyTorch module.
    temperature = jnp.float32(10000.0)

    out = position_embedding(x, temperature, embed_dim=embed_dim)
    out = jax.block_until_ready(out)

    ref = _reference(x, temperature, embed_dim=embed_dim)
    assert out.shape == (B, embed_dim, H, W)
    assert jnp.allclose(out, ref, atol=1e-5, rtol=1e-5)

    print("KERNEL_OK")
</pallas_src>

<mosaic_0001>
module attributes {stable_mosaic.version = 11 : i64} {
  func.func @_broadcast_store_kernel(%arg0: i32, %arg1: memref<16x8x1xf32, #tpu.memory_space<vmem>>, %arg2: memref<16x1x16xf32, #tpu.memory_space<vmem>>, %arg3: memref<32x8x16xf32, #tpu.memory_space<vmem>>) attributes {dimension_semantics = [#tpu.dimension_semantics<parallel>], iteration_bounds = array<i64: 2>, scalar_prefetch = 0 : i64, scratch_operands = 0 : i64, tpu.core_type = #tpu.core_type<tc>, window_params = [{transform_indices = @transform_0, window_bounds = array<i64: 16, 8, 1>}, {pipeline_mode = #tpu.pipeline_mode<synchronous>, transform_indices = @transform_1, window_bounds = array<i64: 16, 1, 16>}, {transform_indices = @transform_2, window_bounds = array<i64: 32, 8, 16>}]} {
    %c0 = arith.constant 0 : index
    %c0_0 = arith.constant 0 : index
    %c0_1 = arith.constant 0 : index
    %0 = vector.load %arg1[%c0, %c0_0, %c0_1] : memref<16x8x1xf32, #tpu.memory_space<vmem>>, vector<16x8x1xf32>
    %1 = vector.shape_cast %0 : vector<16x8x1xf32> to vector<16x8x1xf32>
    %2 = vector.broadcast %1 : vector<16x8x1xf32> to vector<16x8x16xf32>
    %c0_2 = arith.constant 0 : index
    %c0_3 = arith.constant 0 : index
    %c0_4 = arith.constant 0 : index
    %3 = vector.load %arg3[%c0_2, %c0_3, %c0_4] : memref<32x8x16xf32, #tpu.memory_space<vmem>>, vector<16x8x16xf32>
    tpu.vector_store %arg3[%c0_2, %c0_3, %c0_4], %2 {strides = array<i32>} : memref<32x8x16xf32, #tpu.memory_space<vmem>>, vector<16x8x16xf32>,
    %c0_5 = arith.constant 0 : index
    %c0_6 = arith.constant 0 : index
    %c0_7 = arith.constant 0 : index
    %4 = vector.load %arg2[%c0_5, %c0_6, %c0_7] : memref<16x1x16xf32, #tpu.memory_space<vmem>>, vector<16x1x16xf32>
    %5 = vector.shape_cast %4 : vector<16x1x16xf32> to vector<16x1x16xf32>
    %6 = vector.broadcast %5 : vector<16x1x16xf32> to vector<16x8x16xf32>
    %c16 = arith.constant 16 : index
    %c0_8 = arith.constant 0 : index
    %c0_9 = arith.constant 0 : index
    %7 = vector.load %arg3[%c16, %c0_8, %c0_9] : memref<32x8x16xf32, #tpu.memory_space<vmem>>, vector<16x8x16xf32>
    tpu.vector_store %arg3[%c16, %c0_8, %c0_9], %6 {strides = array<i32>} : memref<32x8x16xf32, #tpu.memory_space<vmem>>, vector<16x8x16xf32>,
    return
  }
  func.func @transform_0(%arg0: i32) -> (i32, i32, i32) {
    %c0_i32 = arith.constant 0 : i32
    %c0_i32_0 = arith.constant 0 : i32
    %c0_i32_1 = arith.constant 0 : i32
    return %c0_i32, %arg0, %c0_i32_0 : i32, i32, i32
  }
  func.func @transform_1(%arg0: i32) -> (i32, i32, i32) {
    %c0_i32 = arith.constant 0 : i32
    %c0_i32_0 = arith.constant 0 : i32
    %c0_i32_1 = arith.constant 0 : i32
    %c0_i32_2 = arith.constant 0 : i32
    return %c0_i32, %c0_i32_0, %c0_i32_1 : i32, i32, i32
  }
  func.func @transform_2(%arg0: i32) -> (i32, i32, i32) {
    %c0_i32 = arith.constant 0 : i32
    %c0_i32_0 = arith.constant 0 : i32
    %c0_i32_1 = arith.constant 0 : i32
    return %c0_i32, %arg0, %c0_i32_0 : i32, i32, i32
  }
}

</mosaic_0001>

<llo_original>
// kernel: tpu_custom_call.1
$region0: #{tpu_custom_call.1}
  #allocation0 [shape = 'u32[]', space=smem, size = 0x4, offset = 0x4, fixed_abs, tag = 'smem constant byte address 0x4 - core index']
  #allocation1 [shape = 'u32[144,128]{1,0:T(1,128)}', space=vmem, size = 0x12000, scoped, tag = 'internal scratch']
  %s0 = inlined_call_operand.vmem [shape: f32[16,16,1], index: 0, kind: input, shape index: {}]
  %s1 = inlined_call_operand.vmem [shape: f32[16,1,16], index: 1, kind: input, shape index: {}]
  %s2 = inlined_call_operand.vmem [shape: f32[32,16,16], index: 2, kind: output, shape index: {}]
  %s3 = sld [smem:[#allocation0]]
  $region113: #{tpu_custom_call.1} parent=0
    _
  %s5 = ssub.s32 1, %s3
  %s6 = scalar_select 0, %s5, %s3
  $region1: #{tpu_custom_call.1} parent=0
    #allocation2 [shape = 'u8[131072]{0}', space=vmem, size = 0x20000, scoped, tag = 'input window, operand 0']
    #allocation3 [shape = 'u8[262144]{0}', space=vmem, size = 0x40000, scoped, tag = 'output window, operand 0']
    loop: start=0, step=1, limit=4
    $region2: #{tpu_custom_call.1} parent=1 // loop_pre_header
      _
    $region3: #{tpu_custom_call.1} parent=1 // loop_header
      %s8 = sphi 0, %s12
      %p9 = scmp.ge.s32.totalorder %s8, 4
      %s18 = sphi 0, %s20
      %s21 = sphi 0, %s18
      %s22 = sphi 0, %s21
      %s38 = sphi 0, %s22
      %s42 = sphi 0, %s42
      %s44 = sphi 0, %s42
      %s45 = sphi 0, %s44
      %s59 = sphi 0, %s45
      %s65 = sphi 0, %s67
      %s68 = sphi 0, %s65
      %s69 = sphi 0, %s68
      %s85 = sphi 0, %s69
    $region4: #{tpu_custom_call.1} parent=1 // loop_header_branch
      %11 = sbr.rel (%p9) target = $region8
    $region5: #{tpu_custom_call.1} parent=1 // loop_body
      %s13 = ssub.s32 %s8, 1
      %s14 = ssub.s32 %s8, 2
      %s15 = sadd.s32 %s8, 1
      %s16 = ssub.s32 %s8, %s15
      %p17 = scmp.eq.s32.totalorder %s16, 0
      %s19 = sadd.s32 %s18, 1
      %s20 = scalar_select %p17, %s18, %s19
      %p23 = pneg %p17
      %p24 = scmp.eq.s32.totalorder %s8, 1
      %p25 = por %p23, %p24
      %p26 = scmp.ne.s32.totalorder %s18, %s21
      %p27 = scmp.eq.s32.totalorder %s8, 0
      %p28 = por %p26, %p27
      %p29 = scmp.ne.s32.totalorder %s18, %s21
      %p30 = scmp.eq.s32.totalorder %s13, 1
      %p31 = por %p29, %p30
      %p32 = scmp.ne.s32.totalorder %s21, %s22
      %p33 = scmp.eq.s32.totalorder %s13, 0
      %p34 = por %p32, %p33
      %p35 = scmp.ne.s32.totalorder %s21, %s22
      %p36 = scmp.eq.s32.totalorder %s14, 1
      %p37 = por %p35, %p36
      %p39 = scmp.ne.s32.totalorder %s22, %s38
      %p40 = scmp.eq.s32.totalorder %s14, 0
      %p41 = por %p39, %p40
      %s43 = sadd.s32 %s42, 1
      %p46 = scmp.eq.s32.totalorder %s8, 1
      %p47 = scmp.ne.s32.totalorder %s42, %s44
      %p48 = scmp.eq.s32.totalorder %s8, 0
      %p49 = por %p47, %p48
      %p50 = scmp.ne.s32.totalorder %s42, %s44
      %p51 = scmp.eq.s32.totalorder %s13, 1
      %p52 = por %p50, %p51
      %p53 = scmp.ne.s32.totalorder %s44, %s45
      %p54 = scmp.eq.s32.totalorder %s13, 0
      %p55 = por %p53, %p54
      %p56 = scmp.ne.s32.totalorder %s44, %s45
      %p57 = scmp.eq.s32.totalorder %s14, 1
      %p58 = por %p56, %p57
      %p60 = scmp.ne.s32.totalorder %s45, %s59
      %p61 = scmp.eq.s32.totalorder %s14, 0
      %p62 = por %p60, %p61
      %s63 = ssub.s32 %s8, %s15
      %p64 = scmp.eq.s32.totalorder %s63, 0
      %s66 = sadd.s32 %s65, 1
      %s67 = scalar_select %p64, %s65, %s66
      %p70 = pneg %p64
      %p71 = scmp.eq.s32.totalorder %s8, 1
      %p72 = por %p70, %p71
      %p73 = scmp.ne.s32.totalorder %s65, %s68
      %p74 = scmp.eq.s32.totalorder %s8, 0
      %p75 = por %p73, %p74
      %p76 = scmp.ne.s32.totalorder %s65, %s68
      %p77 = scmp.eq.s32.totalorder %s13, 1
      %p78 = por %p76, %p77
      %p79 = scmp.ne.s32.totalorder %s68, %s69
      %p80 = scmp.eq.s32.totalorder %s13, 0
      %p81 = por %p79, %p80
      %p82 = scmp.ne.s32.totalorder %s68, %s69
      %p83 = scmp.eq.s32.totalorder %s14, 1
      %p84 = por %p82, %p83
      %p86 = scmp.ne.s32.totalorder %s69, %s85
      %p87 = scmp.eq.s32.totalorder %s14, 0
      %p88 = por %p86, %p87
      %p89 = scmp.le.s32.totalorder 1, %s8
      %p90 = scmp.lt.s32.totalorder %s8, 3
      %p91 = pnand %p89, %p90
      %p92 = pneg %p91
      // Predicated region
      $region9: #{tpu_custom_call.1} parent=5 // pred_check
        _
      $region10: #{tpu_custom_call.1} parent=5 // pred_check_branch
        %94 = sbr.rel (%p91) target = $region12
      $region11: #{tpu_custom_call.1} parent=5 // pred_region
        %s95 = ssub.s32 %s8, 1
        // Predicated region
        $region13: #{tpu_custom_call.1} parent=11 // pred_check
          %p96 = pneg %p55
        $region14: #{tpu_custom_call.1} parent=11 // pred_check_branch
          %98 = sbr.rel (%p96) target = $region16
        $region15: #{tpu_custom_call.1} parent=11 // pred_region
          _
        $region16: #{tpu_custom_call.1} parent=11 // pred_fallthru
          _
      $region12: #{tpu_custom_call.1} parent=5 // pred_fallthru
        _
      %p99 = scmp.lt.s32.totalorder %s8, 2
      // Predicated region
      $region17: #{tpu_custom_call.1} parent=5 // pred_check
        %p100 = pneg %p99
      $region18: #{tpu_custom_call.1} parent=5 // pred_check_branch
        %102 = sbr.rel (%p100) target = $region20
      $region19: #{tpu_custom_call.1} parent=5 // pred_region
        // Predicated region
        $region21: #{tpu_custom_call.1} parent=19 // pred_check
          %p103 = pneg %p28
        $region22: #{tpu_custom_call.1} parent=19 // pred_check_branch
          %105 = sbr.rel (%p103) target = $region24
        $region23: #{tpu_custom_call.1} parent=19 // pred_region
          %s106 = sand.u32 %s18, 1
          %s107 = sand.u32 %s18, 1
          %s108 = smul.addr %s107, 128
          %s109 = scalar_lea.vmem [#allocation2], %s108
          %s110 = smul.addr %s8, 8
          %s111 = scalar_lea.vmem %s0, %s110
          // Predicated region
          $region25: #{tpu_custom_call.1} parent=23 // pred_check
            _
          $region26: #{tpu_custom_call.1} parent=23 // pred_check_branch
            %113 = sbr.rel (0) target = $region28
          $region27: #{tpu_custom_call.1} parent=23 // pred_region
            // Predicated region
            $region29: #{tpu_custom_call.1} parent=27 // pred_check
              _
            $region30: #{tpu_custom_call.1} parent=27 // pred_check_branch
              %115 = sbr.rel (0) target = $region32
            $region31: #{tpu_custom_call.1} parent=27 // pred_region
              // Predicated region
              $region44: #{tpu_custom_call.1} parent=31 // pred_check
                _
              $region45: #{tpu_custom_call.1} parent=31 // pred_check_branch
                %160 = sbr.rel (0) target = $region47
              $region46: #{tpu_custom_call.1} parent=31 // pred_region
                loop: start=0, step=1, limit=1
                $region48: #{tpu_custom_call.1} parent=46 // loop_pre_header
                  _
                $region49: #{tpu_custom_call.1} parent=46 // loop_header
                  %s162 = sphi 0, %s166
                  %p163 = scmp.ge.s32.totalorder %s162, 1
                  %s167 = sphi %s111, %s111
                  %s168 = sphi %s109, %s109
                $region50: #{tpu_custom_call.1} parent=46 // loop_header_branch
                  %165 = sbr.rel (%p163) target = $region54
                $region51: #{tpu_custom_call.1} parent=46 // loop_body
                  %v169 = vld [vmem:[%s167] sm:$0xff]
                  %170 = vst [vmem:[%s168] sm:$0xff] %v169
                  %v171 = vld [vmem:[%s167 + $0x10] sm:$0xff]
                  %172 = vst [vmem:[%s168 + $0x8] sm:$0xff] %v171
                  %v173 = vld [vmem:[%s167 + $0x20] sm:$0xff]
                  %174 = vst [vmem:[%s168 + $0x10] sm:$0xff] %v173
                  %v175 = vld [vmem:[%s167 + $0x30] sm:$0xff]
                  %176 = vst [vmem:[%s168 + $0x18] sm:$0xff] %v175
                  %v177 = vld [vmem:[%s167 + $0x40] sm:$0xff]
                  %178 = vst [vmem:[%s168 + $0x20] sm:$0xff] %v177
                  %v179 = vld [vmem:[%s167 + $0x50] sm:$0xff]
                  %180 = vst [vmem:[%s168 + $0x28] sm:$0xff] %v179
                  %v181 = vld [vmem:[%s167 + $0x60] sm:$0xff]
                  %182 = vst [vmem:[%s168 + $0x30] sm:$0xff] %v181
                  %v183 = vld [vmem:[%s167 + $0x70] sm:$0xff]
                  %184 = vst [vmem:[%s168 + $0x38] sm:$0xff] %v183
                  %v185 = vld [vmem:[%s167 + $0x80] sm:$0xff]
                  %186 = vst [vmem:[%s168 + $0x40] sm:$0xff] %v185
                  %v187 = vld [vmem:[%s167 + $0x90] sm:$0xff]
                  %188 = vst [vmem:[%s168 + $0x48] sm:$0xff] %v187
                  %v189 = vld [vmem:[%s167 + $0xa0] sm:$0xff]
                  %190 = vst [vmem:[%s168 + $0x50] sm:$0xff] %v189
                  %v191 = vld [vmem:[%s167 + $0xb0] sm:$0xff]
                  %192 = vst [vmem:[%s168 + $0x58] sm:$0xff] %v191
                  %v193 = vld [vmem:[%s167 + $0xc0] sm:$0xff]
                  %194 = vst [vmem:[%s168 + $0x60] sm:$0xff] %v193
                  %v195 = vld [vmem:[%s167 + $0xd0] sm:$0xff]
                  %196 = vst [vmem:[%s168 + $0x68] sm:$0xff] %v195
                  %v197 = vld [vmem:[%s167 + $0xe0] sm:$0xff]
                  %198 = vst [vmem:[%s168 + $0x70] sm:$0xff] %v197
                  %v199 = vld [vmem:[%s167 + $0xf0] sm:$0xff]
                  %200 = vst [vmem:[%s168 + $0x78] sm:$0xff] %v199
                $region52: #{tpu_custom_call.1} parent=46 // loop_footer
                  %s166 = sadd.s32 1, %s162
                $region53: #{tpu_custom_call.1} parent=46 // loop_footer_branch
                  %161 = sbr.rel target = $region49
                $region54: #{tpu_custom_call.1} parent=46 // loop_exit
                  _
              $region47: #{tpu_custom_call.1} parent=31 // pred_fallthru
                _
              // Predicated region
              $region55: #{tpu_custom_call.1} parent=31 // pred_check
                _
              $region56: #{tpu_custom_call.1} parent=31 // pred_check_branch
                %202 = sbr.rel target = $region58
              $region57: #{tpu_custom_call.1} parent=31 // pred_region
                _
              $region58: #{tpu_custom_call.1} parent=31 // pred_fallthru
                _
            $region32: #{tpu_custom_call.1} parent=27 // pred_fallthru
              _
            // Predicated region
            $region33: #{tpu_custom_call.1} parent=27 // pred_check
              _
            $region34: #{tpu_custom_call.1} parent=27 // pred_check_branch
              %117 = sbr.rel target = $region36
            $region35: #{tpu_custom_call.1} parent=27 // pred_region
              loop: start=0, step=1, limit=1
              $region37: #{tpu_custom_call.1} parent=35 // loop_pre_header
                _
              $region38: #{tpu_custom_call.1} parent=35 // loop_header
                %s120 = sphi 0, %s124
                %p121 = scmp.ge.s32.totalorder %s120, 1
                %s125 = sphi %s111, %s111
                %s126 = sphi %s109, %s109
              $region39: #{tpu_custom_call.1} parent=35 // loop_header_branch
                %123 = sbr.rel (%p121) target = $region43
              $region40: #{tpu_custom_call.1} parent=35 // loop_body
                %v127 = vld [vmem:[%s125] sm:$0xff]
                %128 = vst [vmem:[%s126] sm:$0xff] %v127
                %v129 = vld [vmem:[%s125 + $0x10] sm:$0xff]
                %130 = vst [vmem:[%s126 + $0x8] sm:$0xff] %v129
                %v131 = vld [vmem:[%s125 + $0x20] sm:$0xff]
                %132 = vst [vmem:[%s126 + $0x10] sm:$0xff] %v131
                %v133 = vld [vmem:[%s125 + $0x30] sm:$0xff]
                %134 = vst [vmem:[%s126 + $0x18] sm:$0xff] %v133
                %v135 = vld [vmem:[%s125 + $0x40] sm:$0xff]
                %136 = vst [vmem:[%s126 + $0x20] sm:$0xff] %v135
                %v137 = vld [vmem:[%s125 + $0x50] sm:$0xff]
                %138 = vst [vmem:[%s126 + $0x28] sm:$0xff] %v137
                %v139 = vld [vmem:[%s125 + $0x60] sm:$0xff]
                %140 = vst [vmem:[%s126 + $0x30] sm:$0xff] %v139
                %v141 = vld [vmem:[%s125 + $0x70] sm:$0xff]
                %142 = vst [vmem:[%s126 + $0x38] sm:$0xff] %v141
                %v143 = vld [vmem:[%s125 + $0x80] sm:$0xff]
                %144 = vst [vmem:[%s126 + $0x40] sm:$0xff] %v143
                %v145 = vld [vmem:[%s125 + $0x90] sm:$0xff]
                %146 = vst [vmem:[%s126 + $0x48] sm:$0xff] %v145
                %v147 = vld [vmem:[%s125 + $0xa0] sm:$0xff]
                %148 = vst [vmem:[%s126 + $0x50] sm:$0xff] %v147
                %v149 = vld [vmem:[%s125 + $0xb0] sm:$0xff]
                %150 = vst [vmem:[%s126 + $0x58] sm:$0xff] %v149
                %v151 = vld [vmem:[%s125 + $0xc0] sm:$0xff]
                %152 = vst [vmem:[%s126 + $0x60] sm:$0xff] %v151
                %v153 = vld [vmem:[%s125 + $0xd0] sm:$0xff]
                %154 = vst [vmem:[%s126 + $0x68] sm:$0xff] %v153
                %v155 = vld [vmem:[%s125 + $0xe0] sm:$0xff]
                %156 = vst [vmem:[%s126 + $0x70] sm:$0xff] %v155
                %v157 = vld [vmem:[%s125 + $0xf0] sm:$0xff]
                %158 = vst [vmem:[%s126 + $0x78] sm:$0xff] %v157
              $region41: #{tpu_custom_call.1} parent=35 // loop_footer
                %s124 = sadd.s32 1, %s120
              $region42: #{tpu_custom_call.1} parent=35 // loop_footer_branch
                %119 = sbr.rel target = $region38
              $region43: #{tpu_custom_call.1} parent=35 // loop_exit
                _
            $region36: #{tpu_custom_call.1} parent=27 // pred_fallthru
              _
          $region28: #{tpu_custom_call.1} parent=23 // pred_fallthru
            _
          %203 = vnop
        $region24: #{tpu_custom_call.1} parent=19 // pred_fallthru
          _
      $region20: #{tpu_custom_call.1} parent=5 // pred_fallthru
        _
      %p204 = scmp.le.s32.totalorder 1, %s8
      %p205 = scmp.lt.s32.totalorder %s8, 3
      %p206 = pnand %p204, %p205
      %p207 = pneg %p206
      // Predicated region
      $region59: #{tpu_custom_call.1} parent=5 // pred_check
        _
      $region60: #{tpu_custom_call.1} parent=5 // pred_check_branch
        %209 = sbr.rel (%p206) target = $region62
      $region61: #{tpu_custom_call.1} parent=5 // pred_region
        %s210 = ssub.s32 %s8, 1
        %s211 = sand.u32 %s21, 1
        %s212 = sand.u32 %s21, 1
        %s213 = smul.addr %s212, 128
        %s214 = scalar_lea.vmem [#allocation2], %s213
        // Predicated region
        $region63: #{tpu_custom_call.1} parent=61 // pred_check
          %p215 = pneg %p34
        $region64: #{tpu_custom_call.1} parent=61 // pred_check_branch
          %217 = sbr.rel (%p215) target = $region66
        $region65: #{tpu_custom_call.1} parent=61 // pred_region
          _
        $region66: #{tpu_custom_call.1} parent=61 // pred_fallthru
          _
        %s218 = sand.u32 %s21, 1
        %s219 = sand.u32 %s21, 1
        %s220 = smul.addr %s219, 128
        %s221 = scalar_lea.vmem [#allocation2], %s220
        %p222 = pneg %p34
        %p223 = pneg %p31
        %p224 = pneg %p55
        %p225 = pneg %p52
        %p226 = pneg %p81
        %p227 = pneg %p78
        %s228 = sand.u32 %s68, 1
        %s229 = sand.u32 %s68, 1
        %s230 = smul.addr %s229, 256
        %s231 = scalar_lea.vmem [#allocation3], %s230
        %v232 = vld [vmem:[%s214] sm:$0xff]
        %v233 = vld [vmem:[%s214 + $0x8] sm:$0xff]
        %v234 = vld [vmem:[%s214 + $0x10] sm:$0xff]
        %v235 = vld [vmem:[%s214 + $0x18] sm:$0xff]
        %v236 = vld [vmem:[%s214 + $0x20] sm:$0xff]
        %v237 = vld [vmem:[%s214 + $0x28] sm:$0xff]
        %v238 = vld [vmem:[%s214 + $0x30] sm:$0xff]
        %v239 = vld [vmem:[%s214 + $0x38] sm:$0xff]
        %v240 = vld [vmem:[%s214 + $0x40] sm:$0xff]
        %v241 = vld [vmem:[%s214 + $0x48] sm:$0xff]
        %v242 = vld [vmem:[%s214 + $0x50] sm:$0xff]
        %v243 = vld [vmem:[%s214 + $0x58] sm:$0xff]
        %v244 = vld [vmem:[%s214 + $0x60] sm:$0xff]
        %v245 = vld [vmem:[%s214 + $0x68] sm:$0xff]
        %v246 = vld [vmem:[%s214 + $0x70] sm:$0xff]
        %v247 = vld [vmem:[%s214 + $0x78] sm:$0xff]
        %249 = vset.pattern.permute.xlu0 0
        %250 = vperm.xlu0 %249, %v232
        %v251 = vpop.permute.xlu0 %250
        %254 = vset.pattern.permute.xlu0 0
        %255 = vperm.xlu0 %254, %v233
        %v256 = vpop.permute.xlu0 %255
        %259 = vset.pattern.permute.xlu0 0
        %260 = vperm.xlu0 %259, %v234
        %v261 = vpop.permute.xlu0 %260
        %264 = vset.pattern.permute.xlu0 0
        %265 = vperm.xlu0 %264, %v235
        %v266 = vpop.permute.xlu0 %265
        %269 = vset.pattern.permute.xlu0 0
        %270 = vperm.xlu0 %269, %v236
        %v271 = vpop.permute.xlu0 %270
        %274 = vset.pattern.permute.xlu0 0
        %275 = vperm.xlu0 %274, %v237
        %v276 = vpop.permute.xlu0 %275
        %279 = vset.pattern.permute.xlu0 0
        %280 = vperm.xlu0 %279, %v238
        %v281 = vpop.permute.xlu0 %280
        %284 = vset.pattern.permute.xlu0 0
        %285 = vperm.xlu0 %284, %v239
        %v286 = vpop.permute.xlu0 %285
        %289 = vset.pattern.permute.xlu0 0
        %290 = vperm.xlu0 %289, %v240
        %v291 = vpop.permute.xlu0 %290
        %294 = vset.pattern.permute.xlu0 0
        %295 = vperm.xlu0 %294, %v241
        %v296 = vpop.permute.xlu0 %295
        %299 = vset.pattern.permute.xlu0 0
        %300 = vperm.xlu0 %299, %v242
        %v301 = vpop.permute.xlu0 %300
        %304 = vset.pattern.permute.xlu0 0
        %305 = vperm.xlu0 %304, %v243
        %v306 = vpop.permute.xlu0 %305
        %309 = vset.pattern.permute.xlu0 0
        %310 = vperm.xlu0 %309, %v244
        %v311 = vpop.permute.xlu0 %310
        %314 = vset.pattern.permute.xlu0 0
        %315 = vperm.xlu0 %314, %v245
        %v316 = vpop.permute.xlu0 %315
        %319 = vset.pattern.permute.xlu0 0
        %320 = vperm.xlu0 %319, %v246
        %v321 = vpop.permute.xlu0 %320
        %324 = vset.pattern.permute.xlu0 0
        %325 = vperm.xlu0 %324, %v247
        %v326 = vpop.permute.xlu0 %325
        %vm328 = vcmask 130048
        %329 = vst.msk [vmem:[%s231] sm:$0xff] %vm328, %v251
        %330 = vst.msk [vmem:[%s231 + $0x8] sm:$0xff] %vm328, %v256
        %331 = vst.msk [vmem:[%s231 + $0x10] sm:$0xff] %vm328, %v261
        %332 = vst.msk [vmem:[%s231 + $0x18] sm:$0xff] %vm328, %v266
        %333 = vst.msk [vmem:[%s231 + $0x20] sm:$0xff] %vm328, %v271
        %334 = vst.msk [vmem:[%s231 + $0x28] sm:$0xff] %vm328, %v276
        %335 = vst.msk [vmem:[%s231 + $0x30] sm:$0xff] %vm328, %v281
        %336 = vst.msk [vmem:[%s231 + $0x38] sm:$0xff] %vm328, %v286
        %337 = vst.msk [vmem:[%s231 + $0x40] sm:$0xff] %vm328, %v291
        %338 = vst.msk [vmem:[%s231 + $0x48] sm:$0xff] %vm328, %v296
        %339 = vst.msk [vmem:[%s231 + $0x50] sm:$0xff] %vm328, %v301
        %340 = vst.msk [vmem:[%s231 + $0x58] sm:$0xff] %vm328, %v306
        %341 = vst.msk [vmem:[%s231 + $0x60] sm:$0xff] %vm328, %v311
        %342 = vst.msk [vmem:[%s231 + $0x68] sm:$0xff] %vm328, %v316
        %343 = vst.msk [vmem:[%s231 + $0x70] sm:$0xff] %vm328, %v321
        %344 = vst.msk [vmem:[%s231 + $0x78] sm:$0xff] %vm328, %v326
        %v345 = vld [vmem:[%s1] sm:$0x1]
        %v346 = vld [vmem:[%s1 + $0x1] sm:$0x1]
        %v347 = vld [vmem:[%s1 + $0x2] sm:$0x1]
        %v348 = vld [vmem:[%s1 + $0x3] sm:$0x1]
        %v349 = vld [vmem:[%s1 + $0x4] sm:$0x1]
        %v350 = vld [vmem:[%s1 + $0x5] sm:$0x1]
        %v351 = vld [vmem:[%s1 + $0x6] sm:$0x1]
        %v352 = vld [vmem:[%s1 + $0x7] sm:$0x1]
        %v353 = vld [vmem:[%s1 + $0x8] sm:$0x1]
        %v354 = vld [vmem:[%s1 + $0x9] sm:$0x1]
        %v355 = vld [vmem:[%s1 + $0xa] sm:$0x1]
        %v356 = vld [vmem:[%s1 + $0xb] sm:$0x1]
        %v357 = vld [vmem:[%s1 + $0xc] sm:$0x1]
        %v358 = vld [vmem:[%s1 + $0xd] sm:$0x1]
        %v359 = vld [vmem:[%s1 + $0xe] sm:$0x1]
        %v360 = vld [vmem:[%s1 + $0xf] sm:$0x1]
        %v377 = vlaneseq
        %v378 = vshrl.u32 %v377, 7
        %v379 = vsub.s32 0, %v378
        %v380 = vrot.slane %v345, %v379
        %v381 = vlaneseq
        %v382 = vshrl.u32 %v381, 7
        %v383 = vsub.s32 0, %v382
        %v384 = vrot.slane %v346, %v383
        %v385 = vlaneseq
        %v386 = vshrl.u32 %v385, 7
        %v387 = vsub.s32 0, %v386
        %v388 = vrot.slane %v347, %v387
        %v389 = vlaneseq
        %v390 = vshrl.u32 %v389, 7
        %v391 = vsub.s32 0, %v390
        %v392 = vrot.slane %v348, %v391
        %v393 = vlaneseq
        %v394 = vshrl.u32 %v393, 7
        %v395 = vsub.s32 0, %v394
        %v396 = vrot.slane %v349, %v395
        %v397 = vlaneseq
        %v398 = vshrl.u32 %v397, 7
        %v399 = vsub.s32 0, %v398
        %v400 = vrot.slane %v350, %v399
        %v401 = vlaneseq
        %v402 = vshrl.u32 %v401, 7
        %v403 = vsub.s32 0, %v402
        %v404 = vrot.slane %v351, %v403
        %v405 = vlaneseq
        %v406 = vshrl.u32 %v405, 7
        %v407 = vsub.s32 0, %v406
        %v408 = vrot.slane %v352, %v407
        %v409 = vlaneseq
        %v410 = vshrl.u32 %v409, 7
        %v411 = vsub.s32 0, %v410
        %v412 = vrot.slane %v353, %v411
        %v413 = vlaneseq
        %v414 = vshrl.u32 %v413, 7
        %v415 = vsub.s32 0, %v414
        %v416 = vrot.slane %v354, %v415
        %v417 = vlaneseq
        %v418 = vshrl.u32 %v417, 7
        %v419 = vsub.s32 0, %v418
        %v420 = vrot.slane %v355, %v419
        %v421 = vlaneseq
        %v422 = vshrl.u32 %v421, 7
        %v423 = vsub.s32 0, %v422
        %v424 = vrot.slane %v356, %v423
        %v425 = vlaneseq
        %v426 = vshrl.u32 %v425, 7
        %v427 = vsub.s32 0, %v426
        %v428 = vrot.slane %v357, %v427
        %v429 = vlaneseq
        %v430 = vshrl.u32 %v429, 7
        %v431 = vsub.s32 0, %v430
        %v432 = vrot.slane %v358, %v431
        %v433 = vlaneseq
        %v434 = vshrl.u32 %v433, 7
        %v435 = vsub.s32 0, %v434
        %v436 = vrot.slane %v359, %v435
        %v437 = vlaneseq
        %v438 = vshrl.u32 %v437, 7
        %v439 = vsub.s32 0, %v438
        %v440 = vrot.slane %v360, %v439
        %s457 = scalar_lea.vmem %s231, 128 [#allocation3]
        %458 = vst.msk [vmem:[%s457] sm:$0xff] %vm328, %v380
        %459 = vst.msk [vmem:[%s457 + $0x8] sm:$0xff] %vm328, %v384
        %460 = vst.msk [vmem:[%s457 + $0x10] sm:$0xff] %vm328, %v388
        %461 = vst.msk [vmem:[%s457 + $0x18] sm:$0xff] %vm328, %v392
        %462 = vst.msk [vmem:[%s457 + $0x20] sm:$0xff] %vm328, %v396
        %463 = vst.msk [vmem:[%s457 + $0x28] sm:$0xff] %vm328, %v400
        %464 = vst.msk [vmem:[%s457 + $0x30] sm:$0xff] %vm328, %v404
        %465 = vst.msk [vmem:[%s457 + $0x38] sm:$0xff] %vm328, %v408
        %466 = vst.msk [vmem:[%s457 + $0x40] sm:$0xff] %vm328, %v412
        %467 = vst.msk [vmem:[%s457 + $0x48] sm:$0xff] %vm328, %v416
        %468 = vst.msk [vmem:[%s457 + $0x50] sm:$0xff] %vm328, %v420
        %469 = vst.msk [vmem:[%s457 + $0x58] sm:$0xff] %vm328, %v424
        %470 = vst.msk [vmem:[%s457 + $0x60] sm:$0xff] %vm328, %v428
        %471 = vst.msk [vmem:[%s457 + $0x68] sm:$0xff] %vm328, %v432
        %472 = vst.msk [vmem:[%s457 + $0x70] sm:$0xff] %vm328, %v436
        %473 = vst.msk [vmem:[%s457 + $0x78] sm:$0xff] %vm328, %v440
        %s474 = sand.u32 %s68, 1
        %s475 = sand.u32 %s68, 1
        %s476 = smul.addr %s475, 256
        %s477 = scalar_lea.vmem [#allocation3], %s476
        // Predicated region
        $region67: #{tpu_custom_call.1} parent=61 // pred_check
          %p478 = pneg %p78
        $region68: #{tpu_custom_call.1} parent=61 // pred_check_branch
          %480 = sbr.rel (%p478) target = $region70
        $region69: #{tpu_custom_call.1} parent=61 // pred_region
          %s481 = smul.addr %s13, 8
          %s482 = scalar_lea.vmem %s2, %s481
          // Predicated region
          $region71: #{tpu_custom_call.1} parent=69 // pred_check
            _
          $region72: #{tpu_custom_call.1} parent=69 // pred_check_branch
            %484 = sbr.rel (0) target = $region74
          $region73: #{tpu_custom_call.1} parent=69 // pred_region
            // Predicated region
            $region75: #{tpu_custom_call.1} parent=73 // pred_check
              _
            $region76: #{tpu_custom_call.1} parent=73 // pred_check_branch
              %486 = sbr.rel (0) target = $region78
            $region77: #{tpu_custom_call.1} parent=73 // pred_region
              // Predicated region
              $region90: #{tpu_custom_call.1} parent=77 // pred_check
                _
              $region91: #{tpu_custom_call.1} parent=77 // pred_check_branch
                %563 = sbr.rel (0) target = $region93
              $region92: #{tpu_custom_call.1} parent=77 // pred_region
                loop: start=0, step=1, limit=1
                $region94: #{tpu_custom_call.1} parent=92 // loop_pre_header
                  _
                $region95: #{tpu_custom_call.1} parent=92 // loop_header
                  %s565 = sphi 0, %s569
                  %p566 = scmp.ge.s32.totalorder %s565, 1
                  %s570 = sphi %s477, %s477
                  %s571 = sphi %s482, %s482
                $region96: #{tpu_custom_call.1} parent=92 // loop_header_branch
                  %568 = sbr.rel (%p566) target = $region100
                $region97: #{tpu_custom_call.1} parent=92 // loop_body
                  %v572 = vld [vmem:[%s570] sm:$0xff]
                  %573 = vst [vmem:[%s571] sm:$0xff] %v572
                  %v574 = vld [vmem:[%s570 + $0x8] sm:$0xff]
                  %575 = vst [vmem:[%s571 + $0x10] sm:$0xff] %v574
                  %v576 = vld [vmem:[%s570 + $0x10] sm:$0xff]
                  %577 = vst [vmem:[%s571 + $0x20] sm:$0xff] %v576
                  %v578 = vld [vmem:[%s570 + $0x18] sm:$0xff]
                  %579 = vst [vmem:[%s571 + $0x30] sm:$0xff] %v578
                  %v580 = vld [vmem:[%s570 + $0x20] sm:$0xff]
                  %581 = vst [vmem:[%s571 + $0x40] sm:$0xff] %v580
                  %v582 = vld [vmem:[%s570 + $0x28] sm:$0xff]
                  %583 = vst [vmem:[%s571 + $0x50] sm:$0xff] %v582
                  %v584 = vld [vmem:[%s570 + $0x30] sm:$0xff]
                  %585 = vst [vmem:[%s571 + $0x60] sm:$0xff] %v584
                  %v586 = vld [vmem:[%s570 + $0x38] sm:$0xff]
                  %587 = vst [vmem:[%s571 + $0x70] sm:$0xff] %v586
                  %v588 = vld [vmem:[%s570 + $0x40] sm:$0xff]
                  %589 = vst [vmem:[%s571 + $0x80] sm:$0xff] %v588
                  %v590 = vld [vmem:[%s570 + $0x48] sm:$0xff]
                  %591 = vst [vmem:[%s571 + $0x90] sm:$0xff] %v590
                  %v592 = vld [vmem:[%s570 + $0x50] sm:$0xff]
                  %593 = vst [vmem:[%s571 + $0xa0] sm:$0xff] %v592
                  %v594 = vld [vmem:[%s570 + $0x58] sm:$0xff]
                  %595 = vst [vmem:[%s571 + $0xb0] sm:$0xff] %v594
                  %v596 = vld [vmem:[%s570 + $0x60] sm:$0xff]
                  %597 = vst [vmem:[%s571 + $0xc0] sm:$0xff] %v596
                  %v598 = vld [vmem:[%s570 + $0x68] sm:$0xff]
                  %599 = vst [vmem:[%s571 + $0xd0] sm:$0xff] %v598
                  %v600 = vld [vmem:[%s570 + $0x70] sm:$0xff]
                  %601 = vst [vmem:[%s571 + $0xe0] sm:$0xff] %v600
                  %v602 = vld [vmem:[%s570 + $0x78] sm:$0xff]
                  %603 = vst [vmem:[%s571 + $0xf0] sm:$0xff] %v602
                  %v604 = vld [vmem:[%s570 + $0x80] sm:$0xff]
                  %605 = vst [vmem:[%s571 + $0x100] sm:$0xff] %v604
                  %v606 = vld [vmem:[%s570 + $0x88] sm:$0xff]
                  %607 = vst [vmem:[%s571 + $0x110] sm:$0xff] %v606
                  %v608 = vld [vmem:[%s570 + $0x90] sm:$0xff]
                  %609 = vst [vmem:[%s571 + $0x120] sm:$0xff] %v608
                  %v610 = vld [vmem:[%s570 + $0x98] sm:$0xff]
                  %611 = vst [vmem:[%s571 + $0x130] sm:$0xff] %v610
                  %v612 = vld [vmem:[%s570 + $0xa0] sm:$0xff]
                  %613 = vst [vmem:[%s571 + $0x140] sm:$0xff] %v612
                  %v614 = vld [vmem:[%s570 + $0xa8] sm:$0xff]
                  %615 = vst [vmem:[%s571 + $0x150] sm:$0xff] %v614
                  %v616 = vld [vmem:[%s570 + $0xb0] sm:$0xff]
                  %617 = vst [vmem:[%s571 + $0x160] sm:$0xff] %v616
                  %v618 = vld [vmem:[%s570 + $0xb8] sm:$0xff]
                  %619 = vst [vmem:[%s571 + $0x170] sm:$0xff] %v618
                  %v620 = vld [vmem:[%s570 + $0xc0] sm:$0xff]
                  %621 = vst [vmem:[%s571 + $0x180] sm:$0xff] %v620
                  %v622 = vld [vmem:[%s570 + $0xc8] sm:$0xff]
                  %623 = vst [vmem:[%s571 + $0x190] sm:$0xff] %v622
                  %v624 = vld [vmem:[%s570 + $0xd0] sm:$0xff]
                  %625 = vst [vmem:[%s571 + $0x1a0] sm:$0xff] %v624
                  %v626 = vld [vmem:[%s570 + $0xd8] sm:$0xff]
                  %627 = vst [vmem:[%s571 + $0x1b0] sm:$0xff] %v626
                  %v628 = vld [vmem:[%s570 + $0xe0] sm:$0xff]
                  %629 = vst [vmem:[%s571 + $0x1c0] sm:$0xff] %v628
                  %v630 = vld [vmem:[%s570 + $0xe8] sm:$0xff]
                  %631 = vst [vmem:[%s571 + $0x1d0] sm:$0xff] %v630
                  %v632 = vld [vmem:[%s570 + $0xf0] sm:$0xff]
                  %633 = vst [vmem:[%s571 + $0x1e0] sm:$0xff] %v632
                  %v634 = vld [vmem:[%s570 + $0xf8] sm:$0xff]
                  %635 = vst [vmem:[%s571 + $0x1f0] sm:$0xff] %v634
                $region98: #{tpu_custom_call.1} parent=92 // loop_footer
                  %s569 = sadd.s32 1, %s565
                $region99: #{tpu_custom_call.1} parent=92 // loop_footer_branch
                  %564 = sbr.rel target = $region95
                $region100: #{tpu_custom_call.1} parent=92 // loop_exit
                  _
              $region93: #{tpu_custom_call.1} parent=77 // pred_fallthru
                _
              // Predicated region
              $region101: #{tpu_custom_call.1} parent=77 // pred_check
                _
              $region102: #{tpu_custom_call.1} parent=77 // pred_check_branch
                %637 = sbr.rel target = $region104
              $region103: #{tpu_custom_call.1} parent=77 // pred_region
                _
              $region104: #{tpu_custom_call.1} parent=77 // pred_fallthru
                _
            $region78: #{tpu_custom_call.1} parent=73 // pred_fallthru
              _
            // Predicated region
            $region79: #{tpu_custom_call.1} parent=73 // pred_check
              _
            $region80: #{tpu_custom_call.1} parent=73 // pred_check_branch
              %488 = sbr.rel target = $region82
            $region81: #{tpu_custom_call.1} parent=73 // pred_region
              loop: start=0, step=1, limit=1
              $region83: #{tpu_custom_call.1} parent=81 // loop_pre_header
                _
              $region84: #{tpu_custom_call.1} parent=81 // loop_header
                %s491 = sphi 0, %s495
                %p492 = scmp.ge.s32.totalorder %s491, 1
                %s496 = sphi %s477, %s477
                %s497 = sphi %s482, %s482
              $region85: #{tpu_custom_call.1} parent=81 // loop_header_branch
                %494 = sbr.rel (%p492) target = $region89
              $region86: #{tpu_custom_call.1} parent=81 // loop_body
                %v498 = vld [vmem:[%s496] sm:$0xff]
                %499 = vst [vmem:[%s497] sm:$0xff] %v498
                %v500 = vld [vmem:[%s496 + $0x8] sm:$0xff]
                %501 = vst [vmem:[%s497 + $0x10] sm:$0xff] %v500
                %v502 = vld [vmem:[%s496 + $0x10] sm:$0xff]
                %503 = vst [vmem:[%s497 + $0x20] sm:$0xff] %v502
                %v504 = vld [vmem:[%s496 + $0x18] sm:$0xff]
                %505 = vst [vmem:[%s497 + $0x30] sm:$0xff] %v504
                %v506 = vld [vmem:[%s496 + $0x20] sm:$0xff]
                %507 = vst [vmem:[%s497 + $0x40] sm:$0xff] %v506
                %v508 = vld [vmem:[%s496 + $0x28] sm:$0xff]
                %509 = vst [vmem:[%s497 + $0x50] sm:$0xff] %v508
                %v510 = vld [vmem:[%s496 + $0x30] sm:$0xff]
                %511 = vst [vmem:[%s497 + $0x60] sm:$0xff] %v510
                %v512 = vld [vmem:[%s496 + $0x38] sm:$0xff]
                %513 = vst [vmem:[%s497 + $0x70] sm:$0xff] %v512
                %v514 = vld [vmem:[%s496 + $0x40] sm:$0xff]
                %515 = vst [vmem:[%s497 + $0x80] sm:$0xff] %v514
                %v516 = vld [vmem:[%s496 + $0x48] sm:$0xff]
                %517 = vst [vmem:[%s497 + $0x90] sm:$0xff] %v516
                %v518 = vld [vmem:[%s496 + $0x50] sm:$0xff]
                %519 = vst [vmem:[%s497 + $0xa0] sm:$0xff] %v518
                %v520 = vld [vmem:[%s496 + $0x58] sm:$0xff]
                %521 = vst [vmem:[%s497 + $0xb0] sm:$0xff] %v520
                %v522 = vld [vmem:[%s496 + $0x60] sm:$0xff]
                %523 = vst [vmem:[%s497 + $0xc0] sm:$0xff] %v522
                %v524 = vld [vmem:[%s496 + $0x68] sm:$0xff]
                %525 = vst [vmem:[%s497 + $0xd0] sm:$0xff] %v524
                %v526 = vld [vmem:[%s496 + $0x70] sm:$0xff]
                %527 = vst [vmem:[%s497 + $0xe0] sm:$0xff] %v526
                %v528 = vld [vmem:[%s496 + $0x78] sm:$0xff]
                %529 = vst [vmem:[%s497 + $0xf0] sm:$0xff] %v528
                %v530 = vld [vmem:[%s496 + $0x80] sm:$0xff]
                %531 = vst [vmem:[%s497 + $0x100] sm:$0xff] %v530
                %v532 = vld [vmem:[%s496 + $0x88] sm:$0xff]
                %533 = vst [vmem:[%s497 + $0x110] sm:$0xff] %v532
                %v534 = vld [vmem:[%s496 + $0x90] sm:$0xff]
                %535 = vst [vmem:[%s497 + $0x120] sm:$0xff] %v534
                %v536 = vld [vmem:[%s496 + $0x98] sm:$0xff]
                %537 = vst [vmem:[%s497 + $0x130] sm:$0xff] %v536
                %v538 = vld [vmem:[%s496 + $0xa0] sm:$0xff]
                %539 = vst [vmem:[%s497 + $0x140] sm:$0xff] %v538
                %v540 = vld [vmem:[%s496 + $0xa8] sm:$0xff]
                %541 = vst [vmem:[%s497 + $0x150] sm:$0xff] %v540
                %v542 = vld [vmem:[%s496 + $0xb0] sm:$0xff]
                %543 = vst [vmem:[%s497 + $0x160] sm:$0xff] %v542
                %v544 = vld [vmem:[%s496 + $0xb8] sm:$0xff]
                %545 = vst [vmem:[%s497 + $0x170] sm:$0xff] %v544
                %v546 = vld [vmem:[%s496 + $0xc0] sm:$0xff]
                %547 = vst [vmem:[%s497 + $0x180] sm:$0xff] %v546
                %v548 = vld [vmem:[%s496 + $0xc8] sm:$0xff]
                %549 = vst [vmem:[%s497 + $0x190] sm:$0xff] %v548
                %v550 = vld [vmem:[%s496 + $0xd0] sm:$0xff]
                %551 = vst [vmem:[%s497 + $0x1a0] sm:$0xff] %v550
                %v552 = vld [vmem:[%s496 + $0xd8] sm:$0xff]
                %553 = vst [vmem:[%s497 + $0x1b0] sm:$0xff] %v552
                %v554 = vld [vmem:[%s496 + $0xe0] sm:$0xff]
                %555 = vst [vmem:[%s497 + $0x1c0] sm:$0xff] %v554
                %v556 = vld [vmem:[%s496 + $0xe8] sm:$0xff]
                %557 = vst [vmem:[%s497 + $0x1d0] sm:$0xff] %v556
                %v558 = vld [vmem:[%s496 + $0xf0] sm:$0xff]
                %559 = vst [vmem:[%s497 + $0x1e0] sm:$0xff] %v558
                %v560 = vld [vmem:[%s496 + $0xf8] sm:$0xff]
                %561 = vst [vmem:[%s497 + $0x1f0] sm:$0xff] %v560
              $region87: #{tpu_custom_call.1} parent=81 // loop_footer
                %s495 = sadd.s32 1, %s491
              $region88: #{tpu_custom_call.1} parent=81 // loop_footer_branch
                %490 = sbr.rel target = $region84
              $region89: #{tpu_custom_call.1} parent=81 // loop_exit
                _
            $region82: #{tpu_custom_call.1} parent=73 // pred_fallthru
              _
          $region74: #{tpu_custom_call.1} parent=69 // pred_fallthru
            _
          %638 = vnop
        $region70: #{tpu_custom_call.1} parent=61 // pred_fallthru
          _
      $region62: #{tpu_custom_call.1} parent=5 // pred_fallthru
        _
      %p639 = scmp.le.s32.totalorder 2, %s8
      // Predicated region
      $region105: #{tpu_custom_call.1} parent=5 // pred_check
        %p640 = pneg %p639
      $region106: #{tpu_custom_call.1} parent=5 // pred_check_branch
        %642 = sbr.rel (%p640) target = $region108
      $region107: #{tpu_custom_call.1} parent=5 // pred_region
        %s643 = ssub.s32 %s8, 2
        // Predicated region
        $region109: #{tpu_custom_call.1} parent=107 // pred_check
          %p644 = pneg %p84
        $region110: #{tpu_custom_call.1} parent=107 // pred_check_branch
          %646 = sbr.rel (%p644) target = $region112
        $region111: #{tpu_custom_call.1} parent=107 // pred_region
          %s647 = sand.u32 %s69, 1
          %s648 = sand.u32 %s69, 1
          %s649 = smul.addr %s648, 256
          %s650 = scalar_lea.vmem [#allocation3], %s649
        $region112: #{tpu_custom_call.1} parent=107 // pred_fallthru
          _
      $region108: #{tpu_custom_call.1} parent=5 // pred_fallthru
        _
    $region6: #{tpu_custom_call.1} parent=1 // loop_footer
      %s12 = sadd.s32 1, %s8
    $region7: #{tpu_custom_call.1} parent=1 // loop_footer_branch
      %7 = sbr.rel target = $region3
    $region8: #{tpu_custom_call.1} parent=1 // loop_exit
      _

</llo_original>
